<compile_context>
chip_gen: v7x
topology: tpu7x:2x2x1
jax: 0.10.0
libtpu: 0.0.40
codegen_flags: <defaults>
</compile_context>

<pallas_src>
import functools

import jax
import jax.numpy as jnp
from jax.experimental import pallas as pl
from jax.experimental.pallas import tpu as pltpu

_LANE = 128


def _sum_fusion_kernel(xr_ref, xd_ref, w_ref, b_ref, logits_ref, fused_ref, *, n_classes):
    # Elementwise fusion on the VPU.
    fused = xr_ref[...] + xd_ref[...]
    fused_ref[...] = fused.astype(fused_ref.dtype)      # 'late' features out

    # Linear head on the MXU; weight / bias arrive pre-padded to 128 lanes so
    # the dot and bias add are unmasked.  Accumulate in f32.
    logits_pad = jnp.dot(fused, w_ref[...], preferred_element_type=jnp.float32)
    logits_pad = logits_pad + b_ref[...]
    # Emit only the real classes (tiny masked store; avoids wrapper slice HLO
    # and dead padded writeback).
    logits_ref[...] = logits_pad[:, :n_classes].astype(logits_ref.dtype)


def make_sum_fusion_1d(w, bias):
    """Build the fusion head once.

    w:    [N, C]  (PyTorch nn.Linear weight layout)
    bias: [N]

    Returns fusion(x_rgb, x_depth) -> (logits [B, N], {'late': X_fused [B, C]}).
    Weight/bias are transposed and lane-padded to 128 here, at init time, so
    the per-call path carries no padding HLO.
    """
    n_classes, C = w.shape
    n_pad = ((n_classes + _LANE - 1) // _LANE) * _LANE

    w_t = jnp.asarray(w).T                                           # [C, N]
    w_pad = jnp.zeros((C, n_pad), w_t.dtype).at[:, :n_classes].set(w_t)
    b_pad = jnp.zeros((1, n_pad), bias.dtype).at[:, :n_classes].set(jnp.asarray(bias))

    kernel = functools.partial(_sum_fusion_kernel, n_classes=n_classes)

    def fusion(x_rgb, x_depth):
        B, C_in = x_rgb.shape
        assert C_in == C, f"feature width {C_in} != head width {C}"
        itemsize = jnp.dtype(x_rgb.dtype).itemsize
        cost = pl.CostEstimate(
            flops=2 * B * C * n_pad + B * C,            # matmul + fusion add
            transcendentals=0,
            bytes_accessed=(2 * B * C + C * n_pad + n_pad        # reads
                            + B * C + B * n_classes) * itemsize,  # writes
        )

        logits, fused = pl.pallas_call(
            kernel,
            out_shape=(
                jax.ShapeDtypeStruct((B, n_classes), x_rgb.dtype),  # logits
                jax.ShapeDtypeStruct((B, C), x_rgb.dtype),          # X_fused
            ),
            in_specs=[
                pl.BlockSpec((B, C), lambda: (0, 0)),
                pl.BlockSpec((B, C), lambda: (0, 0)),
                pl.BlockSpec((C, n_pad), lambda: (0, 0)),
                pl.BlockSpec((1, n_pad), lambda: (0, 0)),
            ],
            out_specs=(
                pl.BlockSpec((B, n_classes), lambda: (0, 0)),
                pl.BlockSpec((B, C), lambda: (0, 0)),
            ),
            compiler_params=pltpu.CompilerParams(vmem_limit_bytes=4 << 20),
            cost_estimate=cost,
        )(x_rgb, x_depth, w_pad, b_pad)

        return logits, {"late": fused}

    return fusion


if __name__ == "__main__":
    # TODO(synk): rgb_model / depth_model backbones (efficientnet/ViT) are
    # external submodules; their pooled [B, C] feature outputs are synthesized
    # here as the kernel inputs.
    B = 8            # batch
    C = 1280         # efficientnet_b0 / mobilenet_v4 feature width
    NUM_CLASSES = 8  # small synthetic label count

    key = jax.random.PRNGKey(0)
    k_rgb, k_depth, k_w, k_b = jax.random.split(key, 4)

    x_rgb = jax.random.normal(k_rgb, (B, C), dtype=jnp.float32)
    x_depth = jax.random.normal(k_depth, (B, C), dtype=jnp.float32)

    # PyTorch nn.Linear(C, num_classes): weight [num_classes, C], bias [num_classes].
    bound = 1.0 / (C ** 0.5)
    w = jax.random.uniform(k_w, (NUM_CLASSES, C), jnp.float32, -bound, bound)
    b = jax.random.uniform(k_b, (NUM_CLASSES,), jnp.float32, -bound, bound)

    # Head built (and weight padding done) once, at init.
    fusion_head = make_sum_fusion_1d(w, b)

    logits, extras = fusion_head(x_rgb, x_depth)
    jax.block_until_ready((logits, extras["late"]))

    # Reference check in plain JAX (same math as the PyTorch module).
    fused_ref = x_rgb + x_depth
    logits_ref = fused_ref @ w.T + b
    assert logits.shape == (B, NUM_CLASSES)
    assert extras["late"].shape == (B, C)
    assert jnp.allclose(extras["late"], fused_ref, atol=1e-5)
    assert jnp.allclose(logits, logits_ref, atol=1e-4)

    print("KERNEL_OK")
</pallas_src>

<mosaic_0001>
module attributes {stable_mosaic.version = 11 : i64} {
  func.func @_sum_fusion_kernel(%arg0: memref<8x1280xf32, #tpu.memory_space<vmem>>, %arg1: memref<8x1280xf32, #tpu.memory_space<vmem>>, %arg2: memref<1280x128xf32, #tpu.memory_space<vmem>>, %arg3: memref<1x128xf32, #tpu.memory_space<vmem>>, %arg4: memref<8x8xf32, #tpu.memory_space<vmem>>, %arg5: memref<8x1280xf32, #tpu.memory_space<vmem>>) attributes {dimension_semantics = [], scalar_prefetch = 0 : i64, scratch_operands = 0 : i64, tpu.core_type = #tpu.core_type<tc>} {
    %c0 = arith.constant 0 : index
    %c0_0 = arith.constant 0 : index
    %0 = vector.load %arg0[%c0, %c0_0] : memref<8x1280xf32, #tpu.memory_space<vmem>>, vector<8x1280xf32>
    %c0_1 = arith.constant 0 : index
    %c0_2 = arith.constant 0 : index
    %1 = vector.load %arg1[%c0_1, %c0_2] : memref<8x1280xf32, #tpu.memory_space<vmem>>, vector<8x1280xf32>
    %2 = arith.addf %0, %1 : vector<8x1280xf32>
    %c0_3 = arith.constant 0 : index
    %c0_4 = arith.constant 0 : index
    %3 = vector.load %arg5[%c0_3, %c0_4] : memref<8x1280xf32, #tpu.memory_space<vmem>>, vector<8x1280xf32>
    tpu.vector_store %arg5[%c0_3, %c0_4], %2 {strides = array<i32>} : memref<8x1280xf32, #tpu.memory_space<vmem>>, vector<8x1280xf32>,
    %c0_5 = arith.constant 0 : index
    %c0_6 = arith.constant 0 : index
    %4 = vector.load %arg2[%c0_5, %c0_6] : memref<1280x128xf32, #tpu.memory_space<vmem>>, vector<1280x128xf32>
    %cst = arith.constant dense<0.000000e+00> : vector<8x128xf32>
    %5 = tpu.matmul %2, %4, %cst {dimension_numbers = #tpu.dot_dimension_numbers<[1], [0], [0], [1], [0, 0, 1, 1], [], []>} : vector<8x1280xf32>, vector<1280x128xf32>, vector<8x128xf32> -> vector<8x128xf32>
    %c0_7 = arith.constant 0 : index
    %c0_8 = arith.constant 0 : index
    %6 = vector.load %arg3[%c0_7, %c0_8] : memref<1x128xf32, #tpu.memory_space<vmem>>, vector<1x128xf32>
    %7 = vector.broadcast %6 : vector<1x128xf32> to vector<8x128xf32>
    %8 = arith.addf %5, %7 : vector<8x128xf32>
    %9 = vector.extract_strided_slice %8 {offsets = [0, 0], sizes = [8, 8], strides = [1, 1]} : vector<8x128xf32> to vector<8x8xf32>
    %c0_9 = arith.constant 0 : index
    %c0_10 = arith.constant 0 : index
    %10 = vector.load %arg4[%c0_9, %c0_10] : memref<8x8xf32, #tpu.memory_space<vmem>>, vector<8x8xf32>
    tpu.vector_store %arg4[%c0_9, %c0_10], %9 {strides = array<i32>} : memref<8x8xf32, #tpu.memory_space<vmem>>, vector<8x8xf32>,
    return
  }
}

</mosaic_0001>

<llo_original>
// kernel: tpu_custom_call.1
$region0: #{tpu_custom_call.1}
  #allocation0 [shape = 'u32[]', space=smem, size = 0x4, offset = 0x4, fixed_abs, tag = 'smem constant byte address 0x4 - core index']
  #allocation1 [shape = 'u32[144,128]{1,0:T(1,128)}', space=vmem, size = 0x12000, scoped, tag = 'internal scratch']
  %s0 = inlined_call_operand.hbm [shape: f32[8,1280], index: 0, kind: input, shape index: {}]
  %s1 = inlined_call_operand.hbm [shape: f32[8,1280], index: 1, kind: input, shape index: {}]
  %s2 = inlined_call_operand.hbm [shape: f32[1280,128], index: 2, kind: input, shape index: {}]
  %s3 = inlined_call_operand.vmem [shape: f32[1,128], index: 3, kind: input, shape index: {}]
  %s4 = inlined_call_operand.hbm [shape: f32[8,8], index: 4, kind: output, shape index: {0}]
  %s5 = inlined_call_operand.hbm [shape: f32[8,1280], index: 5, kind: output, shape index: {1}]
  %6 = xla_tuple %s4, %s5
  %s7 = sld [smem:[#allocation0]]
  $region46: #{tpu_custom_call.1} parent=0
    _
  %s9 = ssub.s32 1, %s7
  %s10 = scalar_select 0, %s9, %s7
  $region1: #{tpu_custom_call.1} parent=0
    #allocation2 [shape = 'u8[40960]{0}', space=vmem, size = 0xa000, scoped, tag = 'input window, operand 0, single buffered']
    #allocation3 [shape = 's32[1]{0}', space=sflag, size = 0x4, scoped, tag = 'scoped memory for tpu_custom_call.1']
    #allocation4 [shape = 's32[1]{0}', space=sflag, size = 0x4, scoped, tag = 'scoped memory for tpu_custom_call.1']
    #allocation5 [shape = 'u8[40960]{0}', space=vmem, size = 0xa000, scoped, tag = 'input window, operand 1, single buffered']
    #allocation6 [shape = 's32[1]{0}', space=sflag, size = 0x4, scoped, tag = 'scoped memory for tpu_custom_call.1']
    #allocation7 [shape = 'u8[655360]{0}', space=vmem, size = 0xa0000, scoped, tag = 'input window, operand 2, single buffered']
    #allocation8 [shape = 'u8[4096]{0}', space=vmem, size = 0x1000, scoped, tag = 'output window, operand 0, single buffered']
    #allocation9 [shape = 'u8[40960]{0}', space=vmem, size = 0xa000, scoped, tag = 'output window, operand 1, single buffered']
    #allocation10 [shape = 's32[1]{0}', space=sflag, size = 0x4, scoped, tag = 'scoped memory for tpu_custom_call.1']
    %11 = vsyncpa [#allocation3], 0
    %12 = vsyncpa [#allocation6], 0
    %13 = vsyncpa [#allocation4], 0
    %14 = vsyncpa [#allocation10], 0
    // Predicated region
    $region2: #{tpu_custom_call.1} parent=1 // pred_check
      _
    $region3: #{tpu_custom_call.1} parent=1 // pred_check_branch
      %16 = sbr.rel (0) target = $region5
    $region4: #{tpu_custom_call.1} parent=1 // pred_region
      %s18 = ssub.s32 1280, 1280
      %19 = vsyncadd [#allocation3], %s18
      %s21 = sshll.u32 [#allocation2], 4
      %s22 = int_to_ptr.vmem [resolvable:$true] %s21
      %24 = dma.hbm_to_vmem [thread:$0]  %s0, 1280, %s22, [#allocation3]
    $region5: #{tpu_custom_call.1} parent=1 // pred_fallthru
      _
    // Predicated region
    $region6: #{tpu_custom_call.1} parent=1 // pred_check
      _
    $region7: #{tpu_custom_call.1} parent=1 // pred_check_branch
      %26 = sbr.rel (0) target = $region9
    $region8: #{tpu_custom_call.1} parent=1 // pred_region
      %s28 = ssub.s32 1280, 1280
      %29 = vsyncadd [#allocation6], %s28
      %s31 = sshll.u32 [#allocation5], 4
      %s32 = int_to_ptr.vmem [resolvable:$true] %s31
      %34 = dma.hbm_to_vmem [thread:$0]  %s1, 1280, %s32, [#allocation6]
    $region9: #{tpu_custom_call.1} parent=1 // pred_fallthru
      _
    // Predicated region
    $region10: #{tpu_custom_call.1} parent=1 // pred_check
      _
    $region11: #{tpu_custom_call.1} parent=1 // pred_check_branch
      %36 = sbr.rel (0) target = $region13
    $region12: #{tpu_custom_call.1} parent=1 // pred_region
      %s38 = ssub.s32 20480, 20480
      %39 = vsyncadd [#allocation6], %s38
      %s40 = sshll.u32 [#allocation7], 4
      %s41 = int_to_ptr.vmem [resolvable:$true] %s40
      %46 = dma.hbm_to_vmem [thread:$0]  %s2, 20480, %s41, [#allocation6], 128, 128, 8
    $region13: #{tpu_custom_call.1} parent=1 // pred_fallthru
      _
    // Predicated region
    $region14: #{tpu_custom_call.1} parent=1 // pred_check
      _
    $region15: #{tpu_custom_call.1} parent=1 // pred_check_branch
      %48 = sbr.rel (0) target = $region17
    $region16: #{tpu_custom_call.1} parent=1 // pred_region
      _
    $region17: #{tpu_custom_call.1} parent=1 // pred_fallthru
      _
    // Predicated region
    $region18: #{tpu_custom_call.1} parent=1 // pred_check
      _
    $region19: #{tpu_custom_call.1} parent=1 // pred_check_branch
      %50 = sbr.rel (0) target = $region21
    $region20: #{tpu_custom_call.1} parent=1 // pred_region
      %51 = dma.done [#allocation3], 1280
    $region21: #{tpu_custom_call.1} parent=1 // pred_fallthru
      _
    // Predicated region
    $region22: #{tpu_custom_call.1} parent=1 // pred_check
      _
    $region23: #{tpu_custom_call.1} parent=1 // pred_check_branch
      %53 = sbr.rel (0) target = $region25
    $region24: #{tpu_custom_call.1} parent=1 // pred_region
      %54 = dma.done [#allocation6], 1280
    $region25: #{tpu_custom_call.1} parent=1 // pred_fallthru
      _
    // Predicated region
    $region26: #{tpu_custom_call.1} parent=1 // pred_check
      _
    $region27: #{tpu_custom_call.1} parent=1 // pred_check_branch
      %56 = sbr.rel (0) target = $region29
    $region28: #{tpu_custom_call.1} parent=1 // pred_region
      %57 = dma.done [#allocation6], 20480
    $region29: #{tpu_custom_call.1} parent=1 // pred_fallthru
      _
    %v58 = vld [vmem:[#allocation2] sm:$0xff]
    %v59 = vld [vmem:[#allocation2 + $0x8] sm:$0xff]
    %v60 = vld [vmem:[#allocation2 + $0x10] sm:$0xff]
    %v61 = vld [vmem:[#allocation2 + $0x18] sm:$0xff]
    %v62 = vld [vmem:[#allocation2 + $0x20] sm:$0xff]
    %v63 = vld [vmem:[#allocation2 + $0x28] sm:$0xff]
    %v64 = vld [vmem:[#allocation2 + $0x30] sm:$0xff]
    %v65 = vld [vmem:[#allocation2 + $0x38] sm:$0xff]
    %v66 = vld [vmem:[#allocation2 + $0x40] sm:$0xff]
    %v67 = vld [vmem:[#allocation2 + $0x48] sm:$0xff]
    %v68 = vld [vmem:[#allocation5] sm:$0xff]
    %v69 = vld [vmem:[#allocation5 + $0x8] sm:$0xff]
    %v70 = vld [vmem:[#allocation5 + $0x10] sm:$0xff]
    %v71 = vld [vmem:[#allocation5 + $0x18] sm:$0xff]
    %v72 = vld [vmem:[#allocation5 + $0x20] sm:$0xff]
    %v73 = vld [vmem:[#allocation5 + $0x28] sm:$0xff]
    %v74 = vld [vmem:[#allocation5 + $0x30] sm:$0xff]
    %v75 = vld [vmem:[#allocation5 + $0x38] sm:$0xff]
    %v76 = vld [vmem:[#allocation5 + $0x40] sm:$0xff]
    %v77 = vld [vmem:[#allocation5 + $0x48] sm:$0xff]
    %v78 = vadd.f32 %v58, %v68
    %v79 = vadd.f32 %v59, %v69
    %v80 = vadd.f32 %v60, %v70
    %v81 = vadd.f32 %v61, %v71
    %v82 = vadd.f32 %v62, %v72
    %v83 = vadd.f32 %v63, %v73
    %v84 = vadd.f32 %v64, %v74
    %v85 = vadd.f32 %v65, %v75
    %v86 = vadd.f32 %v66, %v76
    %v87 = vadd.f32 %v67, %v77
    %88 = vst [vmem:[#allocation9] sm:$0xff] %v78
    %89 = vst [vmem:[#allocation9 + $0x8] sm:$0xff] %v79
    %90 = vst [vmem:[#allocation9 + $0x10] sm:$0xff] %v80
    %91 = vst [vmem:[#allocation9 + $0x18] sm:$0xff] %v81
    %92 = vst [vmem:[#allocation9 + $0x20] sm:$0xff] %v82
    %93 = vst [vmem:[#allocation9 + $0x28] sm:$0xff] %v83
    %94 = vst [vmem:[#allocation9 + $0x30] sm:$0xff] %v84
    %95 = vst [vmem:[#allocation9 + $0x38] sm:$0xff] %v85
    %96 = vst [vmem:[#allocation9 + $0x40] sm:$0xff] %v86
    %97 = vst [vmem:[#allocation9 + $0x48] sm:$0xff] %v87
    %v98 = vld [vmem:[#allocation7] sm:$0xff]
    %v99 = vld [vmem:[#allocation7 + $0x8] sm:$0xff]
    %v100 = vld [vmem:[#allocation7 + $0x10] sm:$0xff]
    %v101 = vld [vmem:[#allocation7 + $0x18] sm:$0xff]
    %v102 = vld [vmem:[#allocation7 + $0x20] sm:$0xff]
    %v103 = vld [vmem:[#allocation7 + $0x28] sm:$0xff]
    %v104 = vld [vmem:[#allocation7 + $0x30] sm:$0xff]
    %v105 = vld [vmem:[#allocation7 + $0x38] sm:$0xff]
    %v106 = vld [vmem:[#allocation7 + $0x40] sm:$0xff]
    %v107 = vld [vmem:[#allocation7 + $0x48] sm:$0xff]
    %v108 = vld [vmem:[#allocation7 + $0x50] sm:$0xff]
    %v109 = vld [vmem:[#allocation7 + $0x58] sm:$0xff]
    %v110 = vld [vmem:[#allocation7 + $0x60] sm:$0xff]
    %v111 = vld [vmem:[#allocation7 + $0x68] sm:$0xff]
    %v112 = vld [vmem:[#allocation7 + $0x70] sm:$0xff]
    %v113 = vld [vmem:[#allocation7 + $0x78] sm:$0xff]
    %v114 = vld [vmem:[#allocation7 + $0x80] sm:$0xff]
    %v115 = vld [vmem:[#allocation7 + $0x88] sm:$0xff]
    %v116 = vld [vmem:[#allocation7 + $0x90] sm:$0xff]
    %v117 = vld [vmem:[#allocation7 + $0x98] sm:$0xff]
    %v118 = vld [vmem:[#allocation7 + $0xa0] sm:$0xff]
    %v119 = vld [vmem:[#allocation7 + $0xa8] sm:$0xff]
    %v120 = vld [vmem:[#allocation7 + $0xb0] sm:$0xff]
    %v121 = vld [vmem:[#allocation7 + $0xb8] sm:$0xff]
    %v122 = vld [vmem:[#allocation7 + $0xc0] sm:$0xff]
    %v123 = vld [vmem:[#allocation7 + $0xc8] sm:$0xff]
    %v124 = vld [vmem:[#allocation7 + $0xd0] sm:$0xff]
    %v125 = vld [vmem:[#allocation7 + $0xd8] sm:$0xff]
    %v126 = vld [vmem:[#allocation7 + $0xe0] sm:$0xff]
    %v127 = vld [vmem:[#allocation7 + $0xe8] sm:$0xff]
    %v128 = vld [vmem:[#allocation7 + $0xf0] sm:$0xff]
    %v129 = vld [vmem:[#allocation7 + $0xf8] sm:$0xff]
    %v130 = vld [vmem:[#allocation7 + $0x100] sm:$0xff]
    %v131 = vld [vmem:[#allocation7 + $0x108] sm:$0xff]
    %v132 = vld [vmem:[#allocation7 + $0x110] sm:$0xff]
    %v133 = vld [vmem:[#allocation7 + $0x118] sm:$0xff]
    %v134 = vld [vmem:[#allocation7 + $0x120] sm:$0xff]
    %v135 = vld [vmem:[#allocation7 + $0x128] sm:$0xff]
    %v136 = vld [vmem:[#allocation7 + $0x130] sm:$0xff]
    %v137 = vld [vmem:[#allocation7 + $0x138] sm:$0xff]
    %v138 = vld [vmem:[#allocation7 + $0x140] sm:$0xff]
    %v139 = vld [vmem:[#allocation7 + $0x148] sm:$0xff]
    %v140 = vld [vmem:[#allocation7 + $0x150] sm:$0xff]
    %v141 = vld [vmem:[#allocation7 + $0x158] sm:$0xff]
    %v142 = vld [vmem:[#allocation7 + $0x160] sm:$0xff]
    %v143 = vld [vmem:[#allocation7 + $0x168] sm:$0xff]
    %v144 = vld [vmem:[#allocation7 + $0x170] sm:$0xff]
    %v145 = vld [vmem:[#allocation7 + $0x178] sm:$0xff]
    %v146 = vld [vmem:[#allocation7 + $0x180] sm:$0xff]
    %v147 = vld [vmem:[#allocation7 + $0x188] sm:$0xff]
    %v148 = vld [vmem:[#allocation7 + $0x190] sm:$0xff]
    %v149 = vld [vmem:[#allocation7 + $0x198] sm:$0xff]
    %v150 = vld [vmem:[#allocation7 + $0x1a0] sm:$0xff]
    %v151 = vld [vmem:[#allocation7 + $0x1a8] sm:$0xff]
    %v152 = vld [vmem:[#allocation7 + $0x1b0] sm:$0xff]
    %v153 = vld [vmem:[#allocation7 + $0x1b8] sm:$0xff]
    %v154 = vld [vmem:[#allocation7 + $0x1c0] sm:$0xff]
    %v155 = vld [vmem:[#allocation7 + $0x1c8] sm:$0xff]
    %v156 = vld [vmem:[#allocation7 + $0x1d0] sm:$0xff]
    %v157 = vld [vmem:[#allocation7 + $0x1d8] sm:$0xff]
    %v158 = vld [vmem:[#allocation7 + $0x1e0] sm:$0xff]
    %v159 = vld [vmem:[#allocation7 + $0x1e8] sm:$0xff]
    %v160 = vld [vmem:[#allocation7 + $0x1f0] sm:$0xff]
    %v161 = vld [vmem:[#allocation7 + $0x1f8] sm:$0xff]
    %v162 = vld [vmem:[#allocation7 + $0x200] sm:$0xff]
    %v163 = vld [vmem:[#allocation7 + $0x208] sm:$0xff]
    %v164 = vld [vmem:[#allocation7 + $0x210] sm:$0xff]
    %v165 = vld [vmem:[#allocation7 + $0x218] sm:$0xff]
    %v166 = vld [vmem:[#allocation7 + $0x220] sm:$0xff]
    %v167 = vld [vmem:[#allocation7 + $0x228] sm:$0xff]
    %v168 = vld [vmem:[#allocation7 + $0x230] sm:$0xff]
    %v169 = vld [vmem:[#allocation7 + $0x238] sm:$0xff]
    %v170 = vld [vmem:[#allocation7 + $0x240] sm:$0xff]
    %v171 = vld [vmem:[#allocation7 + $0x248] sm:$0xff]
    %v172 = vld [vmem:[#allocation7 + $0x250] sm:$0xff]
    %v173 = vld [vmem:[#allocation7 + $0x258] sm:$0xff]
    %v174 = vld [vmem:[#allocation7 + $0x260] sm:$0xff]
    %v175 = vld [vmem:[#allocation7 + $0x268] sm:$0xff]
    %v176 = vld [vmem:[#allocation7 + $0x270] sm:$0xff]
    %v177 = vld [vmem:[#allocation7 + $0x278] sm:$0xff]
    %v178 = vld [vmem:[#allocation7 + $0x280] sm:$0xff]
    %v179 = vld [vmem:[#allocation7 + $0x288] sm:$0xff]
    %v180 = vld [vmem:[#allocation7 + $0x290] sm:$0xff]
    %v181 = vld [vmem:[#allocation7 + $0x298] sm:$0xff]
    %v182 = vld [vmem:[#allocation7 + $0x2a0] sm:$0xff]
    %v183 = vld [vmem:[#allocation7 + $0x2a8] sm:$0xff]
    %v184 = vld [vmem:[#allocation7 + $0x2b0] sm:$0xff]
    %v185 = vld [vmem:[#allocation7 + $0x2b8] sm:$0xff]
    %v186 = vld [vmem:[#allocation7 + $0x2c0] sm:$0xff]
    %v187 = vld [vmem:[#allocation7 + $0x2c8] sm:$0xff]
    %v188 = vld [vmem:[#allocation7 + $0x2d0] sm:$0xff]
    %v189 = vld [vmem:[#allocation7 + $0x2d8] sm:$0xff]
    %v190 = vld [vmem:[#allocation7 + $0x2e0] sm:$0xff]
    %v191 = vld [vmem:[#allocation7 + $0x2e8] sm:$0xff]
    %v192 = vld [vmem:[#allocation7 + $0x2f0] sm:$0xff]
    %v193 = vld [vmem:[#allocation7 + $0x2f8] sm:$0xff]
    %v194 = vld [vmem:[#allocation7 + $0x300] sm:$0xff]
    %v195 = vld [vmem:[#allocation7 + $0x308] sm:$0xff]
    %v196 = vld [vmem:[#allocation7 + $0x310] sm:$0xff]
    %v197 = vld [vmem:[#allocation7 + $0x318] sm:$0xff]
    %v198 = vld [vmem:[#allocation7 + $0x320] sm:$0xff]
    %v199 = vld [vmem:[#allocation7 + $0x328] sm:$0xff]
    %v200 = vld [vmem:[#allocation7 + $0x330] sm:$0xff]
    %v201 = vld [vmem:[#allocation7 + $0x338] sm:$0xff]
    %v202 = vld [vmem:[#allocation7 + $0x340] sm:$0xff]
    %v203 = vld [vmem:[#allocation7 + $0x348] sm:$0xff]
    %v204 = vld [vmem:[#allocation7 + $0x350] sm:$0xff]
    %v205 = vld [vmem:[#allocation7 + $0x358] sm:$0xff]
    %v206 = vld [vmem:[#allocation7 + $0x360] sm:$0xff]
    %v207 = vld [vmem:[#allocation7 + $0x368] sm:$0xff]
    %v208 = vld [vmem:[#allocation7 + $0x370] sm:$0xff]
    %v209 = vld [vmem:[#allocation7 + $0x378] sm:$0xff]
    %v210 = vld [vmem:[#allocation7 + $0x380] sm:$0xff]
    %v211 = vld [vmem:[#allocation7 + $0x388] sm:$0xff]
    %v212 = vld [vmem:[#allocation7 + $0x390] sm:$0xff]
    %v213 = vld [vmem:[#allocation7 + $0x398] sm:$0xff]
    %v214 = vld [vmem:[#allocation7 + $0x3a0] sm:$0xff]
    %v215 = vld [vmem:[#allocation7 + $0x3a8] sm:$0xff]
    %v216 = vld [vmem:[#allocation7 + $0x3b0] sm:$0xff]
    %v217 = vld [vmem:[#allocation7 + $0x3b8] sm:$0xff]
    %v218 = vld [vmem:[#allocation7 + $0x3c0] sm:$0xff]
    %v219 = vld [vmem:[#allocation7 + $0x3c8] sm:$0xff]
    %v220 = vld [vmem:[#allocation7 + $0x3d0] sm:$0xff]
    %v221 = vld [vmem:[#allocation7 + $0x3d8] sm:$0xff]
    %v222 = vld [vmem:[#allocation7 + $0x3e0] sm:$0xff]
    %v223 = vld [vmem:[#allocation7 + $0x3e8] sm:$0xff]
    %v224 = vld [vmem:[#allocation7 + $0x3f0] sm:$0xff]
    %v225 = vld [vmem:[#allocation7 + $0x3f8] sm:$0xff]
    %v226 = vld [vmem:[#allocation7 + $0x400] sm:$0xff]
    %v227 = vld [vmem:[#allocation7 + $0x408] sm:$0xff]
    %v228 = vld [vmem:[#allocation7 + $0x410] sm:$0xff]
    %v229 = vld [vmem:[#allocation7 + $0x418] sm:$0xff]
    %v230 = vld [vmem:[#allocation7 + $0x420] sm:$0xff]
    %v231 = vld [vmem:[#allocation7 + $0x428] sm:$0xff]
    %v232 = vld [vmem:[#allocation7 + $0x430] sm:$0xff]
    %v233 = vld [vmem:[#allocation7 + $0x438] sm:$0xff]
    %v234 = vld [vmem:[#allocation7 + $0x440] sm:$0xff]
    %v235 = vld [vmem:[#allocation7 + $0x448] sm:$0xff]
    %v236 = vld [vmem:[#allocation7 + $0x450] sm:$0xff]
    %v237 = vld [vmem:[#allocation7 + $0x458] sm:$0xff]
    %v238 = vld [vmem:[#allocation7 + $0x460] sm:$0xff]
    %v239 = vld [vmem:[#allocation7 + $0x468] sm:$0xff]
    %v240 = vld [vmem:[#allocation7 + $0x470] sm:$0xff]
    %v241 = vld [vmem:[#allocation7 + $0x478] sm:$0xff]
    %v242 = vld [vmem:[#allocation7 + $0x480] sm:$0xff]
    %v243 = vld [vmem:[#allocation7 + $0x488] sm:$0xff]
    %v244 = vld [vmem:[#allocation7 + $0x490] sm:$0xff]
    %v245 = vld [vmem:[#allocation7 + $0x498] sm:$0xff]
    %v246 = vld [vmem:[#allocation7 + $0x4a0] sm:$0xff]
    %v247 = vld [vmem:[#allocation7 + $0x4a8] sm:$0xff]
    %v248 = vld [vmem:[#allocation7 + $0x4b0] sm:$0xff]
    %v249 = vld [vmem:[#allocation7 + $0x4b8] sm:$0xff]
    %v250 = vld [vmem:[#allocation7 + $0x4c0] sm:$0xff]
    %v251 = vld [vmem:[#allocation7 + $0x4c8] sm:$0xff]
    %v252 = vld [vmem:[#allocation7 + $0x4d0] sm:$0xff]
    %v253 = vld [vmem:[#allocation7 + $0x4d8] sm:$0xff]
    %v254 = vld [vmem:[#allocation7 + $0x4e0] sm:$0xff]
    %v255 = vld [vmem:[#allocation7 + $0x4e8] sm:$0xff]
    %v256 = vld [vmem:[#allocation7 + $0x4f0] sm:$0xff]
    %v257 = vld [vmem:[#allocation7 + $0x4f8] sm:$0xff]
    %v258 = vld [vmem:[%s3] sm:$0x1]
    %v260 = vlaneseq
    %v261 = vshrl.u32 %v260, 7
    %v262 = vsub.s32 0, %v261
    %v263 = vrot.slane %v258, %v262
    %265 = vmatprep.subr.mxu0 0.0
    %266 = vmatpush1.msra.mxu0 %v98
    %267 = vmatprep.subr.mxu0 0.0
    %268 = vmatpush1.msra.mxu0 %v99
    %269 = vmatprep.subr.mxu0 0.0
    %270 = vmatpush1.msra.mxu0 %v100
    %271 = vmatprep.subr.mxu0 0.0
    %272 = vmatpush1.msra.mxu0 %v101
    %273 = vmatprep.subr.mxu0 0.0
    %274 = vmatpush1.msra.mxu0 %v102
    %275 = vmatprep.subr.mxu0 0.0
    %276 = vmatpush1.msra.mxu0 %v103
    %277 = vmatprep.subr.mxu0 0.0
    %278 = vmatpush1.msra.mxu0 %v104
    %279 = vmatprep.subr.mxu0 0.0
    %280 = vmatpush1.msra.mxu0 %v105
    %281 = vmatprep.subr.mxu0 0.0
    %282 = vmatpush1.msra.mxu0 %v106
    %283 = vmatprep.subr.mxu0 0.0
    %284 = vmatpush1.msra.mxu0 %v107
    %285 = vmatprep.subr.mxu0 0.0
    %286 = vmatpush1.msra.mxu0 %v108
    %287 = vmatprep.subr.mxu0 0.0
    %288 = vmatpush1.msra.mxu0 %v109
    %289 = vmatprep.subr.mxu0 0.0
    %290 = vmatpush1.msra.mxu0 %v110
    %291 = vmatprep.subr.mxu0 0.0
    %292 = vmatpush1.msra.mxu0 %v111
    %293 = vmatprep.subr.mxu0 0.0
    %294 = vmatpush1.msra.mxu0 %v112
    %295 = vmatprep.subr.mxu0 0.0
    %296 = vmatpush1.msra.mxu0 %v113
    %297 = vmatprep.subr.mxu0 0.0
    %298 = vmatpush1.msra.mxu0 %v114
    %299 = vmatprep.subr.mxu0 0.0
    %300 = vmatpush1.msra.mxu0 %v115
    %301 = vmatprep.subr.mxu0 0.0
    %302 = vmatpush1.msra.mxu0 %v116
    %303 = vmatprep.subr.mxu0 0.0
    %304 = vmatpush1.msra.mxu0 %v117
    %305 = vmatprep.subr.mxu0 0.0
    %306 = vmatpush1.msra.mxu0 %v118
    %307 = vmatprep.subr.mxu0 0.0
    %308 = vmatpush1.msra.mxu0 %v119
    %309 = vmatprep.subr.mxu0 0.0
    %310 = vmatpush1.msra.mxu0 %v120
    %311 = vmatprep.subr.mxu0 0.0
    %312 = vmatpush1.msra.mxu0 %v121
    %313 = vmatprep.subr.mxu0 0.0
    %314 = vmatpush1.msra.mxu0 %v122
    %315 = vmatprep.subr.mxu0 0.0
    %316 = vmatpush1.msra.mxu0 %v123
    %317 = vmatprep.subr.mxu0 0.0
    %318 = vmatpush1.msra.mxu0 %v124
    %319 = vmatprep.subr.mxu0 0.0
    %320 = vmatpush1.msra.mxu0 %v125
    %321 = vmatprep.subr.mxu0 0.0
    %322 = vmatpush1.msra.mxu0 %v126
    %323 = vmatprep.subr.mxu0 0.0
    %324 = vmatpush1.msra.mxu0 %v127
    %325 = vmatprep.subr.mxu0 0.0
    %326 = vmatpush1.msra.mxu0 %v128
    %327 = vmatprep.subr.mxu0 0.0
    %328 = vmatpush1.msra.mxu0 %v129
    %329 = vmatprep.mubr.f32.mxu0 %v79
    %330 = vmatmul.mubr.f32.gmra.mrb[0].mxu0 %v78
    %v331 = vpop.f32.mrb[0].mxu0
    %v332 = vadd.f32 %v263, %v331
    %v333 = vpop.f32.mrb[0].mxu0
    %334 = vdwg.mxu0
    %335 = vmatprep.subr.mxu0 0.0
    %336 = vmatpush1.msra.mxu0 %v130
    %337 = vmatprep.subr.mxu0 0.0
    %338 = vmatpush1.msra.mxu0 %v131
    %339 = vmatprep.subr.mxu0 0.0
    %340 = vmatpush1.msra.mxu0 %v132
    %341 = vmatprep.subr.mxu0 0.0
    %342 = vmatpush1.msra.mxu0 %v133
    %343 = vmatprep.subr.mxu0 0.0
    %344 = vmatpush1.msra.mxu0 %v134
    %345 = vmatprep.subr.mxu0 0.0
    %346 = vmatpush1.msra.mxu0 %v135
    %347 = vmatprep.subr.mxu0 0.0
    %348 = vmatpush1.msra.mxu0 %v136
    %349 = vmatprep.subr.mxu0 0.0
    %350 = vmatpush1.msra.mxu0 %v137
    %351 = vmatprep.subr.mxu0 0.0
    %352 = vmatpush1.msra.mxu0 %v138
    %353 = vmatprep.subr.mxu0 0.0
    %354 = vmatpush1.msra.mxu0 %v139
    %355 = vmatprep.subr.mxu0 0.0
    %356 = vmatpush1.msra.mxu0 %v140
    %357 = vmatprep.subr.mxu0 0.0
    %358 = vmatpush1.msra.mxu0 %v141
    %359 = vmatprep.subr.mxu0 0.0
    %360 = vmatpush1.msra.mxu0 %v142
    %361 = vmatprep.subr.mxu0 0.0
    %362 = vmatpush1.msra.mxu0 %v143
    %363 = vmatprep.subr.mxu0 0.0
    %364 = vmatpush1.msra.mxu0 %v144
    %365 = vmatprep.subr.mxu0 0.0
    %366 = vmatpush1.msra.mxu0 %v145
    %367 = vmatprep.subr.mxu0 0.0
    %368 = vmatpush1.msra.mxu0 %v146
    %369 = vmatprep.subr.mxu0 0.0
    %370 = vmatpush1.msra.mxu0 %v147
    %371 = vmatprep.subr.mxu0 0.0
    %372 = vmatpush1.msra.mxu0 %v148
    %373 = vmatprep.subr.mxu0 0.0
    %374 = vmatpush1.msra.mxu0 %v149
    %375 = vmatprep.subr.mxu0 0.0
    %376 = vmatpush1.msra.mxu0 %v150
    %377 = vmatprep.subr.mxu0 0.0
    %378 = vmatpush1.msra.mxu0 %v151
    %379 = vmatprep.subr.mxu0 0.0
    %380 = vmatpush1.msra.mxu0 %v152
    %381 = vmatprep.subr.mxu0 0.0
    %382 = vmatpush1.msra.mxu0 %v153
    %383 = vmatprep.subr.mxu0 0.0
    %384 = vmatpush1.msra.mxu0 %v154
    %385 = vmatprep.subr.mxu0 0.0
    %386 = vmatpush1.msra.mxu0 %v155
    %387 = vmatprep.subr.mxu0 0.0
    %388 = vmatpush1.msra.mxu0 %v156
    %389 = vmatprep.subr.mxu0 0.0
    %390 = vmatpush1.msra.mxu0 %v157
    %391 = vmatprep.subr.mxu0 0.0
    %392 = vmatpush1.msra.mxu0 %v158
    %393 = vmatprep.subr.mxu0 0.0
    %394 = vmatpush1.msra.mxu0 %v159
    %395 = vmatprep.subr.mxu0 0.0
    %396 = vmatpush1.msra.mxu0 %v160
    %397 = vmatprep.subr.mxu0 0.0
    %398 = vmatpush1.msra.mxu0 %v161
    %399 = vmatprep.mubr.f32.mxu0 %v81
    %400 = vmatmul.mubr.f32.gmra.mrb[0].mxu0 %v80
    %v401 = vpop.f32.mrb[0].mxu0
    %v402 = vadd.f32 %v332, %v401
    %v403 = vpop.f32.mrb[0].mxu0
    %404 = vdwg.mxu0
    %405 = vmatprep.subr.mxu0 0.0
    %406 = vmatpush1.msra.mxu0 %v162
    %407 = vmatprep.subr.mxu0 0.0
    %408 = vmatpush1.msra.mxu0 %v163
    %409 = vmatprep.subr.mxu0 0.0
    %410 = vmatpush1.msra.mxu0 %v164
    %411 = vmatprep.subr.mxu0 0.0
    %412 = vmatpush1.msra.mxu0 %v165
    %413 = vmatprep.subr.mxu0 0.0
    %414 = vmatpush1.msra.mxu0 %v166
    %415 = vmatprep.subr.mxu0 0.0
    %416 = vmatpush1.msra.mxu0 %v167
    %417 = vmatprep.subr.mxu0 0.0
    %418 = vmatpush1.msra.mxu0 %v168
    %419 = vmatprep.subr.mxu0 0.0
    %420 = vmatpush1.msra.mxu0 %v169
    %421 = vmatprep.subr.mxu0 0.0
    %422 = vmatpush1.msra.mxu0 %v170
    %423 = vmatprep.subr.mxu0 0.0
    %424 = vmatpush1.msra.mxu0 %v171
    %425 = vmatprep.subr.mxu0 0.0
    %426 = vmatpush1.msra.mxu0 %v172
    %427 = vmatprep.subr.mxu0 0.0
    %428 = vmatpush1.msra.mxu0 %v173
    %429 = vmatprep.subr.mxu0 0.0
    %430 = vmatpush1.msra.mxu0 %v174
    %431 = vmatprep.subr.mxu0 0.0
    %432 = vmatpush1.msra.mxu0 %v175
    %433 = vmatprep.subr.mxu0 0.0
    %434 = vmatpush1.msra.mxu0 %v176
    %435 = vmatprep.subr.mxu0 0.0
    %436 = vmatpush1.msra.mxu0 %v177
    %437 = vmatprep.subr.mxu0 0.0
    %438 = vmatpush1.msra.mxu0 %v178
    %439 = vmatprep.subr.mxu0 0.0
    %440 = vmatpush1.msra.mxu0 %v179
    %441 = vmatprep.subr.mxu0 0.0
    %442 = vmatpush1.msra.mxu0 %v180
    %443 = vmatprep.subr.mxu0 0.0
    %444 = vmatpush1.msra.mxu0 %v181
    %445 = vmatprep.subr.mxu0 0.0
    %446 = vmatpush1.msra.mxu0 %v182
    %447 = vmatprep.subr.mxu0 0.0
    %448 = vmatpush1.msra.mxu0 %v183
    %449 = vmatprep.subr.mxu0 0.0
    %450 = vmatpush1.msra.mxu0 %v184
    %451 = vmatprep.subr.mxu0 0.0
    %452 = vmatpush1.msra.mxu0 %v185
    %453 = vmatprep.subr.mxu0 0.0
    %454 = vmatpush1.msra.mxu0 %v186
    %455 = vmatprep.subr.mxu0 0.0
    %456 = vmatpush1.msra.mxu0 %v187
    %457 = vmatprep.subr.mxu0 0.0
    %458 = vmatpush1.msra.mxu0 %v188
    %459 = vmatprep.subr.mxu0 0.0
    %460 = vmatpush1.msra.mxu0 %v189
    %461 = vmatprep.subr.mxu0 0.0
    %462 = vmatpush1.msra.mxu0 %v190
    %463 = vmatprep.subr.mxu0 0.0
    %464 = vmatpush1.msra.mxu0 %v191
    %465 = vmatprep.subr.mxu0 0.0
    %466 = vmatpush1.msra.mxu0 %v192
    %467 = vmatprep.subr.mxu0 0.0
    %468 = vmatpush1.msra.mxu0 %v193
    %469 = vmatprep.mubr.f32.mxu0 %v83
    %470 = vmatmul.mubr.f32.gmra.mrb[0].mxu0 %v82
    %v471 = vpop.f32.mrb[0].mxu0
    %v472 = vadd.f32 %v402, %v471
    %v473 = vpop.f32.mrb[0].mxu0
    %474 = vdwg.mxu0
    %475 = vmatprep.subr.mxu0 0.0
    %476 = vmatpush1.msra.mxu0 %v194
    %477 = vmatprep.subr.mxu0 0.0
    %478 = vmatpush1.msra.mxu0 %v195
    %479 = vmatprep.subr.mxu0 0.0
    %480 = vmatpush1.msra.mxu0 %v196
    %481 = vmatprep.subr.mxu0 0.0
    %482 = vmatpush1.msra.mxu0 %v197
    %483 = vmatprep.subr.mxu0 0.0
    %484 = vmatpush1.msra.mxu0 %v198
    %485 = vmatprep.subr.mxu0 0.0
    %486 = vmatpush1.msra.mxu0 %v199
    %487 = vmatprep.subr.mxu0 0.0
    %488 = vmatpush1.msra.mxu0 %v200
    %489 = vmatprep.subr.mxu0 0.0
    %490 = vmatpush1.msra.mxu0 %v201
    %491 = vmatprep.subr.mxu0 0.0
    %492 = vmatpush1.msra.mxu0 %v202
    %493 = vmatprep.subr.mxu0 0.0
    %494 = vmatpush1.msra.mxu0 %v203
    %495 = vmatprep.subr.mxu0 0.0
    %496 = vmatpush1.msra.mxu0 %v204
    %497 = vmatprep.subr.mxu0 0.0
    %498 = vmatpush1.msra.mxu0 %v205
    %499 = vmatprep.subr.mxu0 0.0
    %500 = vmatpush1.msra.mxu0 %v206
    %501 = vmatprep.subr.mxu0 0.0
    %502 = vmatpush1.msra.mxu0 %v207
    %503 = vmatprep.subr.mxu0 0.0
    %504 = vmatpush1.msra.mxu0 %v208
    %505 = vmatprep.subr.mxu0 0.0
    %506 = vmatpush1.msra.mxu0 %v209
    %507 = vmatprep.subr.mxu0 0.0
    %508 = vmatpush1.msra.mxu0 %v210
    %509 = vmatprep.subr.mxu0 0.0
    %510 = vmatpush1.msra.mxu0 %v211
    %511 = vmatprep.subr.mxu0 0.0
    %512 = vmatpush1.msra.mxu0 %v212
    %513 = vmatprep.subr.mxu0 0.0
    %514 = vmatpush1.msra.mxu0 %v213
    %515 = vmatprep.subr.mxu0 0.0
    %516 = vmatpush1.msra.mxu0 %v214
    %517 = vmatprep.subr.mxu0 0.0
    %518 = vmatpush1.msra.mxu0 %v215
    %519 = vmatprep.subr.mxu0 0.0
    %520 = vmatpush1.msra.mxu0 %v216
    %521 = vmatprep.subr.mxu0 0.0
    %522 = vmatpush1.msra.mxu0 %v217
    %523 = vmatprep.subr.mxu0 0.0
    %524 = vmatpush1.msra.mxu0 %v218
    %525 = vmatprep.subr.mxu0 0.0
    %526 = vmatpush1.msra.mxu0 %v219
    %527 = vmatprep.subr.mxu0 0.0
    %528 = vmatpush1.msra.mxu0 %v220
    %529 = vmatprep.subr.mxu0 0.0
    %530 = vmatpush1.msra.mxu0 %v221
    %531 = vmatprep.subr.mxu0 0.0
    %532 = vmatpush1.msra.mxu0 %v222
    %533 = vmatprep.subr.mxu0 0.0
    %534 = vmatpush1.msra.mxu0 %v223
    %535 = vmatprep.subr.mxu0 0.0
    %536 = vmatpush1.msra.mxu0 %v224
    %537 = vmatprep.subr.mxu0 0.0
    %538 = vmatpush1.msra.mxu0 %v225
    %539 = vmatprep.mubr.f32.mxu0 %v85
    %540 = vmatmul.mubr.f32.gmra.mrb[0].mxu0 %v84
    %v541 = vpop.f32.mrb[0].mxu0
    %v542 = vadd.f32 %v472, %v541
    %v543 = vpop.f32.mrb[0].mxu0
    %544 = vdwg.mxu0
    %545 = vmatprep.subr.mxu0 0.0
    %546 = vmatpush1.msra.mxu0 %v226
    %547 = vmatprep.subr.mxu0 0.0
    %548 = vmatpush1.msra.mxu0 %v227
    %549 = vmatprep.subr.mxu0 0.0
    %550 = vmatpush1.msra.mxu0 %v228
    %551 = vmatprep.subr.mxu0 0.0
    %552 = vmatpush1.msra.mxu0 %v229
    %553 = vmatprep.subr.mxu0 0.0
    %554 = vmatpush1.msra.mxu0 %v230
    %555 = vmatprep.subr.mxu0 0.0
    %556 = vmatpush1.msra.mxu0 %v231
    %557 = vmatprep.subr.mxu0 0.0
    %558 = vmatpush1.msra.mxu0 %v232
    %559 = vmatprep.subr.mxu0 0.0
    %560 = vmatpush1.msra.mxu0 %v233
    %561 = vmatprep.subr.mxu0 0.0
    %562 = vmatpush1.msra.mxu0 %v234
    %563 = vmatprep.subr.mxu0 0.0
    %564 = vmatpush1.msra.mxu0 %v235
    %565 = vmatprep.subr.mxu0 0.0
    %566 = vmatpush1.msra.mxu0 %v236
    %567 = vmatprep.subr.mxu0 0.0
    %568 = vmatpush1.msra.mxu0 %v237
    %569 = vmatprep.subr.mxu0 0.0
    %570 = vmatpush1.msra.mxu0 %v238
    %571 = vmatprep.subr.mxu0 0.0
    %572 = vmatpush1.msra.mxu0 %v239
    %573 = vmatprep.subr.mxu0 0.0
    %574 = vmatpush1.msra.mxu0 %v240
    %575 = vmatprep.subr.mxu0 0.0
    %576 = vmatpush1.msra.mxu0 %v241
    %577 = vmatprep.subr.mxu0 0.0
    %578 = vmatpush1.msra.mxu0 %v242
    %579 = vmatprep.subr.mxu0 0.0
    %580 = vmatpush1.msra.mxu0 %v243
    %581 = vmatprep.subr.mxu0 0.0
    %582 = vmatpush1.msra.mxu0 %v244
    %583 = vmatprep.subr.mxu0 0.0
    %584 = vmatpush1.msra.mxu0 %v245
    %585 = vmatprep.subr.mxu0 0.0
    %586 = vmatpush1.msra.mxu0 %v246
    %587 = vmatprep.subr.mxu0 0.0
    %588 = vmatpush1.msra.mxu0 %v247
    %589 = vmatprep.subr.mxu0 0.0
    %590 = vmatpush1.msra.mxu0 %v248
    %591 = vmatprep.subr.mxu0 0.0
    %592 = vmatpush1.msra.mxu0 %v249
    %593 = vmatprep.subr.mxu0 0.0
    %594 = vmatpush1.msra.mxu0 %v250
    %595 = vmatprep.subr.mxu0 0.0
    %596 = vmatpush1.msra.mxu0 %v251
    %597 = vmatprep.subr.mxu0 0.0
    %598 = vmatpush1.msra.mxu0 %v252
    %599 = vmatprep.subr.mxu0 0.0
    %600 = vmatpush1.msra.mxu0 %v253
    %601 = vmatprep.subr.mxu0 0.0
    %602 = vmatpush1.msra.mxu0 %v254
    %603 = vmatprep.subr.mxu0 0.0
    %604 = vmatpush1.msra.mxu0 %v255
    %605 = vmatprep.subr.mxu0 0.0
    %606 = vmatpush1.msra.mxu0 %v256
    %607 = vmatprep.subr.mxu0 0.0
    %608 = vmatpush1.msra.mxu0 %v257
    %609 = vmatprep.mubr.f32.mxu0 %v87
    %610 = vmatmul.mubr.f32.gmra.mrb[0].mxu0 %v86
    %v611 = vpop.f32.mrb[0].mxu0
    %v612 = vadd.f32 %v542, %v611
    %v613 = vpop.f32.mrb[0].mxu0
    %614 = vdwg.mxu0
    %vm615 = vcmask 64512
    %616 = vst.msk [vmem:[#allocation8] sm:$0xff] %vm615, %v612
    // Predicated region
    $region30: #{tpu_custom_call.1} parent=1 // pred_check
      _
    $region31: #{tpu_custom_call.1} parent=1 // pred_check_branch
      %618 = sbr.rel (0) target = $region33
    $region32: #{tpu_custom_call.1} parent=1 // pred_region
      %s620 = ssub.s32 128, 128
      %621 = vsyncadd [#allocation4], %s620
      %s623 = sshll.u32 [#allocation8], 4
      %s624 = int_to_ptr.vmem [resolvable:$true] %s623
      %626 = dma.vmem_to_hbm [thread:$0]  %s624, 128, %s4, [#allocation4]
    $region33: #{tpu_custom_call.1} parent=1 // pred_fallthru
      _
    // Predicated region
    $region34: #{tpu_custom_call.1} parent=1 // pred_check
      _
    $region35: #{tpu_custom_call.1} parent=1 // pred_check_branch
      %628 = sbr.rel (0) target = $region37
    $region36: #{tpu_custom_call.1} parent=1 // pred_region
      %s630 = ssub.s32 1280, 1280
      %631 = vsyncadd [#allocation10], %s630
      %s633 = sshll.u32 [#allocation9], 4
      %s634 = int_to_ptr.vmem [resolvable:$true] %s633
      %636 = dma.vmem_to_hbm [thread:$0]  %s634, 1280, %s5, [#allocation10]
    $region37: #{tpu_custom_call.1} parent=1 // pred_fallthru
      _
    // Predicated region
    $region38: #{tpu_custom_call.1} parent=1 // pred_check
      _
    $region39: #{tpu_custom_call.1} parent=1 // pred_check_branch
      %638 = sbr.rel (0) target = $region41
    $region40: #{tpu_custom_call.1} parent=1 // pred_region
      %639 = dma.done [#allocation4], 128
    $region41: #{tpu_custom_call.1} parent=1 // pred_fallthru
      _
    // Predicated region
    $region42: #{tpu_custom_call.1} parent=1 // pred_check
      _
    $region43: #{tpu_custom_call.1} parent=1 // pred_check_branch
      %641 = sbr.rel (0) target = $region45
    $region44: #{tpu_custom_call.1} parent=1 // pred_region
      %642 = dma.done [#allocation10], 1280
    $region45: #{tpu_custom_call.1} parent=1 // pred_fallthru
      _
    %643 = vsyncpa [#allocation3], 1
    %644 = vsyncpa [#allocation6], 1
    %645 = vsyncpa [#allocation4], 1
    %646 = vsyncpa [#allocation10], 1

</llo_original>
